<compile_context>
chip_gen: v7x
topology: tpu7x:2x2x1
jax: 0.10.0
libtpu: 0.0.40
codegen_flags: <defaults>
</compile_context>

<pallas_src>
import functools

import jax
import jax.numpy as jnp
from jax.experimental import pallas as pl
from jax.experimental.pallas import tpu as pltpu


def _layernorm_kernel(x_ref, w_ref, b_ref, o_ref, *, eps):
    # x_ref: (tile_rows, H) VMEM tile; accumulate in f32 regardless of input dtype.
    x = x_ref[...].astype(jnp.float32)
    # Fused single-pass statistics: both reductions read x once, no serial
    # reduce -> subtract -> reduce dependency and no d*d temporary.
    mean = jnp.mean(x, axis=-1, keepdims=True)
    mean_sq = jnp.mean(x * x, axis=-1, keepdims=True)
    var = jnp.maximum(mean_sq - mean * mean, 0.0)   # guard cancellation
    inv = jax.lax.rsqrt(var + eps)                  # eps inside the sqrt (TF style)
    w = w_ref[...].astype(jnp.float32)              # (1, H)
    b = b_ref[...].astype(jnp.float32)              # (1, H)
    o_ref[...] = ((x - mean) * inv * w + b).astype(o_ref.dtype)


def _chip_info():
    """(tensorcores_per_chip, physical_vmem_bytes, is_v7x) with safe fallbacks."""
    num_cores = 1
    vmem_bytes = 128 * 1024 * 1024
    is_v7x = False
    try:
        kind = str(getattr(jax.devices()[0], "device_kind", "")).lower()
        if "v7" in kind or "tpu7" in kind:
            is_v7x = True
            num_cores = 2
            vmem_bytes = 64 * 1024 * 1024
        elif "v4" in kind or "v5p" in kind:
            num_cores = 2
    except Exception:
        pass
    try:
        info = pltpu.get_tpu_info()
        vmem_bytes = int(getattr(info, "vmem_capacity_bytes", vmem_bytes))
    except Exception:
        pass
    return num_cores, vmem_bytes, is_v7x


def _round_up(v, m):
    return ((v + m - 1) // m) * m


def _pick_tile_rows(rows, hidden, itemsize, num_cores, budget_bytes, in_buffers,
                    requested=None):
    """Choose a row-tile size.

    Per-row VMEM footprint counted:
      * `in_buffers` pipelined input tiles + 2 output tiles in the input dtype
      * ~3 full-tile f32 temporaries inside the kernel (x upcast, x*x / xn,
        output chain) -> 12 * hidden bytes.
    Rounded to the sublane packing multiple (8 f32 / 16 bf16 / 32 int8-fp8).
    On multi-TC chips the tile is additionally clamped so each core gets >= 2
    grid steps (keeps per-core double-buffering); single-TC chips skip that.
    """
    sublane = 8 * max(1, 4 // max(1, itemsize))     # f32:8, bf16:16, int8/fp8:32
    per_row_bytes = (in_buffers + 2) * hidden * itemsize + 12 * hidden
    vmem_cap_rows = max(sublane, (budget_bytes // per_row_bytes // sublane) * sublane)

    if requested is not None:
        tr = _round_up(max(1, int(requested)), sublane)
        return min(tr, vmem_cap_rows)               # never blow the VMEM budget

    tr = min(2048, vmem_cap_rows)
    tr = min(tr, _round_up(rows, sublane))          # no point exceeding the work
    if num_cores >= 2:
        # >= 2 steps per TensorCore so megacore sharding still double-buffers.
        target_steps = 2 * num_cores
        per_step = _round_up(-(-rows // target_steps), sublane)
        tr = min(tr, max(sublane, per_step))
    tr = max(sublane, (tr // sublane) * sublane)
    return tr


def bert_layer_norm(x, weight, bias, eps=1e-12, *, tile_rows=None):
    """LayerNorm over the last dim of x, TF-style (epsilon inside the sqrt)."""
    orig_shape = x.shape
    hidden = orig_shape[-1]
    rows = 1
    for d in orig_shape[:-1]:
        rows *= d

    x2 = x.reshape(rows, hidden)
    w2 = weight.reshape(1, hidden)
    b2 = bias.reshape(1, hidden)

    itemsize = jnp.dtype(x.dtype).itemsize
    num_cores, vmem_phys, is_v7x = _chip_info()

    # Scoped VMEM limit: half of physical (64 MiB on 128 MiB chips, 32 MiB on
    # v7x); size tiles against ~3/4 of that so double-buffering + f32 temps
    # always fit with headroom.
    vmem_limit = min(64 * 1024 * 1024, vmem_phys // 2)
    budget = (vmem_limit * 3) // 4
    in_buffers = 3 if is_v7x else 2

    tr = _pick_tile_rows(rows, hidden, itemsize, num_cores, budget, in_buffers,
                         tile_rows)

    # No padding: Pallas masks the ragged last block. OOB rows read undefined
    # data and compute garbage, but the reduction is strictly per-row and OOB
    # writes are masked, so valid rows are never contaminated.
    grid = (pl.cdiv(rows, tr),)

    x_spec = pl.BlockSpec((tr, hidden), lambda i: (i, 0))
    if is_v7x:
        # Deeper input pipeline on v7x: at 3.2 TB/s the per-step overhead is a
        # larger fraction, so keep the DMA engine fed with a 3-deep buffer.
        try:
            x_spec = pl.BlockSpec((tr, hidden), lambda i: (i, 0),
                                  pipeline_mode=pl.Buffered(3))
        except TypeError:
            pass  # older API without pipeline_mode: fall back to default 2-deep

    cost = pl.CostEstimate(
        flops=7 * rows * hidden,
        transcendentals=rows,
        bytes_accessed=2 * rows * hidden * itemsize
        + 2 * hidden * jnp.dtype(weight.dtype).itemsize,
    )

    out = pl.pallas_call(
        functools.partial(_layernorm_kernel, eps=eps),
        out_shape=jax.ShapeDtypeStruct((rows, hidden), x.dtype),
        grid_spec=pltpu.PrefetchScalarGridSpec(
            num_scalar_prefetch=0,
            grid=grid,
            in_specs=[
                x_spec,
                pl.BlockSpec((1, hidden), lambda i: (0, 0)),
                pl.BlockSpec((1, hidden), lambda i: (0, 0)),
            ],
            out_specs=pl.BlockSpec((tr, hidden), lambda i: (i, 0)),
        ),
        compiler_params=pltpu.CompilerParams(
            dimension_semantics=("parallel",),
            vmem_limit_bytes=vmem_limit,
        ),
        cost_estimate=cost,
    )(x2, w2, b2)

    return out.reshape(orig_shape)


def _reference(x, weight, bias, eps=1e-12):
    u = jnp.mean(x, axis=-1, keepdims=True)
    s = jnp.mean((x - u) ** 2, axis=-1, keepdims=True)
    xn = (x - u) / jnp.sqrt(s + eps)
    return weight * xn + bias


if __name__ == "__main__":
    key = jax.random.PRNGKey(0)
    k_x, k_w, k_b = jax.random.split(key, 3)

    batch, seq, hidden = 2, 8, 32
    x = jax.random.normal(k_x, (batch, seq, hidden), dtype=jnp.float32)

    # Module __init__ uses ones/zeros; use deterministic non-trivial values
    # here to exercise the scale/shift path.
    weight = 1.0 + 0.1 * jax.random.normal(k_w, (hidden,), dtype=jnp.float32)
    bias = 0.1 * jax.random.normal(k_b, (hidden,), dtype=jnp.float32)

    out = bert_layer_norm(x, weight, bias, eps=1e-12)
    out = jax.block_until_ready(out)

    ref = _reference(x, weight, bias, eps=1e-12)
    assert out.shape == x.shape
    assert jnp.allclose(out, ref, atol=1e-5, rtol=1e-5), "mismatch vs reference"

    # Exercise a ragged (non-multiple-of-tile) row count too, to validate the
    # cdiv-based grid with masked last block.
    rows_odd = 13
    x_odd = jax.random.normal(k_x, (rows_odd, hidden), dtype=jnp.float32)
    out_odd = jax.block_until_ready(bert_layer_norm(x_odd, weight, bias))
    ref_odd = _reference(x_odd, weight, bias)
    assert jnp.allclose(out_odd, ref_odd, atol=1e-5, rtol=1e-5), "ragged mismatch"

    print("KERNEL_OK")
</pallas_src>

<mosaic_0001>
module attributes {stable_mosaic.version = 11 : i64} {
  func.func @_layernorm_kernel(%arg0: i32, %arg1: memref<16x32xf32, #tpu.memory_space<vmem>>, %arg2: memref<1x32xf32, #tpu.memory_space<vmem>>, %arg3: memref<1x32xf32, #tpu.memory_space<vmem>>, %arg4: memref<16x32xf32, #tpu.memory_space<vmem>>) attributes {dimension_semantics = [#tpu.dimension_semantics<parallel>], iteration_bounds = array<i64: 1>, scalar_prefetch = 0 : i64, scratch_operands = 0 : i64, tpu.core_type = #tpu.core_type<tc>, window_params = [{transform_indices = @transform_0, window_bounds = array<i64: 16, 32>}, {pipeline_mode = #tpu.pipeline_mode<synchronous>, transform_indices = @transform_1, window_bounds = array<i64: 1, 32>}, {pipeline_mode = #tpu.pipeline_mode<synchronous>, transform_indices = @transform_2, window_bounds = array<i64: 1, 32>}, {transform_indices = @transform_3, window_bounds = array<i64: 16, 32>}]} {
    %c0 = arith.constant 0 : index
    %c0_0 = arith.constant 0 : index
    %0 = vector.load %arg1[%c0, %c0_0] : memref<16x32xf32, #tpu.memory_space<vmem>>, vector<16x32xf32>
    %cst = arith.constant dense<0.000000e+00> : vector<16xf32>
    %1 = vector.multi_reduction <add>, %0, %cst [1] : vector<16x32xf32> to vector<16xf32>
    %2 = vector.shape_cast %1 : vector<16xf32> to vector<16x1xf32>
    %cst_1 = arith.constant 3.200000e+01 : f32
    %3 = vector.broadcast %cst_1 : f32 to vector<16x1xf32>
    %4 = arith.divf %2, %3 : vector<16x1xf32>
    %5 = arith.mulf %0, %0 : vector<16x32xf32>
    %cst_2 = arith.constant dense<0.000000e+00> : vector<16xf32>
    %6 = vector.multi_reduction <add>, %5, %cst_2 [1] : vector<16x32xf32> to vector<16xf32>
    %7 = vector.shape_cast %6 : vector<16xf32> to vector<16x1xf32>
    %cst_3 = arith.constant 3.200000e+01 : f32
    %8 = vector.broadcast %cst_3 : f32 to vector<16x1xf32>
    %9 = arith.divf %7, %8 : vector<16x1xf32>
    %10 = arith.mulf %4, %4 : vector<16x1xf32>
    %11 = arith.subf %9, %10 : vector<16x1xf32>
    %cst_4 = arith.constant 0.000000e+00 : f32
    %12 = vector.broadcast %cst_4 : f32 to vector<16x1xf32>
    %13 = arith.maximumf %11, %12 : vector<16x1xf32>
    %cst_5 = arith.constant 9.99999996E-13 : f32
    %14 = vector.broadcast %cst_5 : f32 to vector<16x1xf32>
    %15 = arith.addf %13, %14 : vector<16x1xf32>
    %16 = math.rsqrt %15 : vector<16x1xf32>
    %c0_6 = arith.constant 0 : index
    %c0_7 = arith.constant 0 : index
    %17 = vector.load %arg2[%c0_6, %c0_7] : memref<1x32xf32, #tpu.memory_space<vmem>>, vector<1x32xf32>
    %c0_8 = arith.constant 0 : index
    %c0_9 = arith.constant 0 : index
    %18 = vector.load %arg3[%c0_8, %c0_9] : memref<1x32xf32, #tpu.memory_space<vmem>>, vector<1x32xf32>
    %19 = vector.broadcast %4 : vector<16x1xf32> to vector<16x32xf32>
    %20 = arith.subf %0, %19 : vector<16x32xf32>
    %21 = vector.broadcast %16 : vector<16x1xf32> to vector<16x32xf32>
    %22 = arith.mulf %20, %21 : vector<16x32xf32>
    %23 = vector.broadcast %17 : vector<1x32xf32> to vector<16x32xf32>
    %24 = arith.mulf %22, %23 : vector<16x32xf32>
    %25 = vector.broadcast %18 : vector<1x32xf32> to vector<16x32xf32>
    %26 = arith.addf %24, %25 : vector<16x32xf32>
    %c0_10 = arith.constant 0 : index
    %c0_11 = arith.constant 0 : index
    %27 = vector.load %arg4[%c0_10, %c0_11] : memref<16x32xf32, #tpu.memory_space<vmem>>, vector<16x32xf32>
    tpu.vector_store %arg4[%c0_10, %c0_11], %26 {strides = array<i32>} : memref<16x32xf32, #tpu.memory_space<vmem>>, vector<16x32xf32>,
    return
  }
  func.func @transform_0(%arg0: i32) -> (i32, i32) {
    %c0_i32 = arith.constant 0 : i32
    %c0_i32_0 = arith.constant 0 : i32
    return %arg0, %c0_i32 : i32, i32
  }
  func.func @transform_1(%arg0: i32) -> (i32, i32) {
    %c0_i32 = arith.constant 0 : i32
    %c0_i32_0 = arith.constant 0 : i32
    %c0_i32_1 = arith.constant 0 : i32
    return %c0_i32, %c0_i32_0 : i32, i32
  }
  func.func @transform_2(%arg0: i32) -> (i32, i32) {
    %c0_i32 = arith.constant 0 : i32
    %c0_i32_0 = arith.constant 0 : i32
    %c0_i32_1 = arith.constant 0 : i32
    return %c0_i32, %c0_i32_0 : i32, i32
  }
  func.func @transform_3(%arg0: i32) -> (i32, i32) {
    %c0_i32 = arith.constant 0 : i32
    %c0_i32_0 = arith.constant 0 : i32
    return %arg0, %c0_i32 : i32, i32
  }
}

</mosaic_0001>

<llo_original>
// kernel: tpu_custom_call.1
$region0: #{tpu_custom_call.1}
  #allocation0 [shape = 'u32[]', space=smem, size = 0x4, offset = 0x4, fixed_abs, tag = 'smem constant byte address 0x4 - core index']
  #allocation1 [shape = 'u32[144,128]{1,0:T(1,128)}', space=vmem, size = 0x12000, scoped, tag = 'internal scratch']
  %s0 = inlined_call_operand.hbm [shape: f32[16,32], index: 0, kind: input, shape index: {}]
  %s1 = inlined_call_operand.hbm [shape: f32[1,32], index: 1, kind: input, shape index: {}]
  %s2 = inlined_call_operand.hbm [shape: f32[1,32], index: 2, kind: input, shape index: {}]
  %s3 = inlined_call_operand.hbm [shape: f32[16,32], index: 3, kind: output, shape index: {}]
  %s4 = sld [smem:[#allocation0]]
  $region34: #{tpu_custom_call.1} parent=0
    _
  %s6 = ssub.s32 1, %s4
  %s7 = scalar_select 0, %s6, %s4
  $region1: #{tpu_custom_call.1} parent=0
    #allocation2 [shape = 'u8[8192]{0}', space=vmem, size = 0x2000, scoped, tag = 'input window, operand 0, single buffered']
    #allocation3 [shape = 's32[1]{0}', space=sflag, size = 0x4, scoped, tag = 'scoped memory for tpu_custom_call.1']
    #allocation4 [shape = 's32[1]{0}', space=sflag, size = 0x4, scoped, tag = 'scoped memory for tpu_custom_call.1']
    #allocation5 [shape = 'u8[512]{0}', space=vmem, size = 0x400, scoped, tag = 'input window, operand 1, single buffered']
    #allocation6 [shape = 's32[1]{0}', space=sflag, size = 0x4, scoped, tag = 'scoped memory for tpu_custom_call.1']
    #allocation7 [shape = 'u8[512]{0}', space=vmem, size = 0x400, scoped, tag = 'input window, operand 2, single buffered']
    #allocation8 [shape = 'u8[8192]{0}', space=vmem, size = 0x2000, scoped, tag = 'output window, operand 0, single buffered']
    %8 = vsyncpa [#allocation3], 0
    %9 = vsyncpa [#allocation6], 0
    %10 = vsyncpa [#allocation4], 0
    // Predicated region
    $region2: #{tpu_custom_call.1} parent=1 // pred_check
      _
    $region3: #{tpu_custom_call.1} parent=1 // pred_check_branch
      %12 = sbr.rel (0) target = $region5
    $region4: #{tpu_custom_call.1} parent=1 // pred_region
      %s14 = ssub.s32 256, 256
      %15 = vsyncadd [#allocation3], %s14
      %s16 = sshll.u32 [#allocation2], 4
      %s17 = int_to_ptr.vmem [resolvable:$true] %s16
      %22 = dma.hbm_to_vmem [thread:$0]  %s0, 256, %s17, [#allocation3], 128, 128, 8
    $region5: #{tpu_custom_call.1} parent=1 // pred_fallthru
      _
    // Predicated region
    $region6: #{tpu_custom_call.1} parent=1 // pred_check
      _
    $region7: #{tpu_custom_call.1} parent=1 // pred_check_branch
      %24 = sbr.rel (0) target = $region9
    $region8: #{tpu_custom_call.1} parent=1 // pred_region
      %s26 = ssub.s32 16, 16
      %27 = vsyncadd [#allocation6], %s26
      %s29 = sshll.u32 [#allocation5], 4
      %s30 = int_to_ptr.vmem [resolvable:$true] %s29
      %32 = dma.hbm_to_vmem [thread:$0]  %s1, 16, %s30, [#allocation6]
    $region9: #{tpu_custom_call.1} parent=1 // pred_fallthru
      _
    // Predicated region
    $region10: #{tpu_custom_call.1} parent=1 // pred_check
      _
    $region11: #{tpu_custom_call.1} parent=1 // pred_check_branch
      %34 = sbr.rel (0) target = $region13
    $region12: #{tpu_custom_call.1} parent=1 // pred_region
      %s36 = ssub.s32 16, 16
      %37 = vsyncadd [#allocation6], %s36
      %s39 = sshll.u32 [#allocation7], 4
      %s40 = int_to_ptr.vmem [resolvable:$true] %s39
      %42 = dma.hbm_to_vmem [thread:$0]  %s2, 16, %s40, [#allocation6]
    $region13: #{tpu_custom_call.1} parent=1 // pred_fallthru
      _
    // Predicated region
    $region14: #{tpu_custom_call.1} parent=1 // pred_check
      _
    $region15: #{tpu_custom_call.1} parent=1 // pred_check_branch
      %44 = sbr.rel (0) target = $region17
    $region16: #{tpu_custom_call.1} parent=1 // pred_region
      %45 = dma.done [#allocation3], 256
    $region17: #{tpu_custom_call.1} parent=1 // pred_fallthru
      _
    // Predicated region
    $region18: #{tpu_custom_call.1} parent=1 // pred_check
      _
    $region19: #{tpu_custom_call.1} parent=1 // pred_check_branch
      %47 = sbr.rel (0) target = $region21
    $region20: #{tpu_custom_call.1} parent=1 // pred_region
      %48 = dma.done [#allocation6], 16
    $region21: #{tpu_custom_call.1} parent=1 // pred_fallthru
      _
    // Predicated region
    $region22: #{tpu_custom_call.1} parent=1 // pred_check
      _
    $region23: #{tpu_custom_call.1} parent=1 // pred_check_branch
      %50 = sbr.rel (0) target = $region25
    $region24: #{tpu_custom_call.1} parent=1 // pred_region
      %51 = dma.done [#allocation6], 16
    $region25: #{tpu_custom_call.1} parent=1 // pred_fallthru
      _
    %v52 = vld [vmem:[#allocation2] sm:$0xff]
    %v53 = vld [vmem:[#allocation2 + $0x8] sm:$0xff]
    %vm54 = vcmask 261120
    %v55 = vsel %vm54, %v52, 0.0
    %56 = vadd.xlane.f32.xlu0 %v55
    %v57 = vpop.xlane.xlu0 %56
    %v58 = vsel %vm54, %v53, 0.0
    %59 = vadd.xlane.f32.xlu0 %v58
    %v60 = vpop.xlane.xlu0 %59
    %v61 = vrcp.pop 32.0
    %v62 = vmul.f32 %v57, %v61
    %v63 = vmul.f32 %v60, %v61
    %v64 = vmul.f32 %v52, %v52
    %v65 = vmul.f32 %v53, %v53
    %v66 = vsel %vm54, %v64, 0.0
    %67 = vadd.xlane.f32.xlu0 %v66
    %v68 = vpop.xlane.xlu0 %67
    %v69 = vsel %vm54, %v65, 0.0
    %70 = vadd.xlane.f32.xlu0 %v69
    %v71 = vpop.xlane.xlu0 %70
    %v72 = vmul.f32 %v68, %v61
    %v73 = vmul.f32 %v71, %v61
    %v74 = vmul.f32 %v62, %v62
    %v75 = vmul.f32 %v63, %v63
    %v76 = vsub.f32 %v72, %v74
    %v77 = vsub.f32 %v73, %v75
    %v78 = vmax.f32 %v76, 0.0
    %v79 = vmax.f32 %v77, 0.0
    %v80 = vadd.f32 %v78, 1e-12
    %v81 = vadd.f32 %v79, 1e-12
    %v82 = vrsqrt.pop %v80
    %v83 = vrsqrt.pop %v81
    %v84 = vld [vmem:[#allocation5] sm:$0x1]
    %v85 = vld [vmem:[#allocation7] sm:$0x1]
    %v86 = vsub.f32 %v52, %v62
    %v87 = vsub.f32 %v53, %v63
    %v88 = vmul.f32 %v86, %v82
    %v89 = vmul.f32 %v87, %v83
    %v91 = vlaneseq
    %v92 = vshrl.u32 %v91, 7
    %v93 = vsub.s32 0, %v92
    %v94 = vrot.slane %v84, %v93
    %v96 = vmul.f32 %v88, %v94
    %v97 = vmul.f32 %v89, %v94
    %v99 = vlaneseq
    %v100 = vshrl.u32 %v99, 7
    %v101 = vsub.s32 0, %v100
    %v102 = vrot.slane %v85, %v101
    %v104 = vadd.f32 %v96, %v102
    %v105 = vadd.f32 %v97, %v102
    %106 = vst.msk [vmem:[#allocation8] sm:$0xff] %vm54, %v104
    %107 = vst.msk [vmem:[#allocation8 + $0x8] sm:$0xff] %vm54, %v105
    // Predicated region
    $region26: #{tpu_custom_call.1} parent=1 // pred_check
      _
    $region27: #{tpu_custom_call.1} parent=1 // pred_check_branch
      %109 = sbr.rel (0) target = $region29
    $region28: #{tpu_custom_call.1} parent=1 // pred_region
      %s111 = ssub.s32 256, 256
      %112 = vsyncadd [#allocation4], %s111
      %s113 = sshll.u32 [#allocation8], 4
      %s114 = int_to_ptr.vmem [resolvable:$true] %s113
      %119 = dma.vmem_to_hbm [thread:$0]  %s114, 256, %s3, [#allocation4], 128, 128, 8
    $region29: #{tpu_custom_call.1} parent=1 // pred_fallthru
      _
    // Predicated region
    $region30: #{tpu_custom_call.1} parent=1 // pred_check
      _
    $region31: #{tpu_custom_call.1} parent=1 // pred_check_branch
      %121 = sbr.rel (0) target = $region33
    $region32: #{tpu_custom_call.1} parent=1 // pred_region
      %122 = dma.done [#allocation4], 256
    $region33: #{tpu_custom_call.1} parent=1 // pred_fallthru
      _
    %123 = vsyncpa [#allocation3], 1
    %124 = vsyncpa [#allocation6], 1
    %125 = vsyncpa [#allocation4], 1

</llo_original>
